<compile_context>
chip_gen: v5e
topology: v5e:2x2
jax: 0.10.0
libtpu: 0.0.40
codegen_flags: <defaults>
</compile_context>

<pallas_src>
import jax
import jax.numpy as jnp
from jax.experimental import pallas as pl
from jax.experimental.pallas import tpu as pltpu


def _make_diffusion_risk_kernel(risk_factor: float):
    rf = float(risk_factor)

    def kernel(x_ref, o_ref):
        # Compute in f32 (no-op for f32 inputs), write back in the I/O dtype.
        x = x_ref[...].astype(jnp.float32)
        o_ref[...] = jax.nn.sigmoid(x * rf).astype(o_ref.dtype)

    return kernel


def diffusion_risk(dif_data: jax.Array, risk_factor: float) -> jax.Array:
    """Pallas TPU implementation of DiffusionRisk.forward."""
    orig_shape = dif_data.shape
    dtype = dif_data.dtype
    total = dif_data.size
    dtype_bytes = jnp.dtype(dtype).itemsize

    # Pick the widest lane dimension (multiple of 128) that divides the total
    # element count -> pure reshape, no padding, lane-dense wide stores.
    lane = None
    for cand in (4096, 2048, 1024, 512, 256, 128):
        if total % cand == 0:
            lane = cand
            break

    needs_pad = lane is None
    if needs_pad:
        # Rare fallback: pad by < 128 elements so the slab is lane-aligned.
        lane = 128
        padded_total = pl.cdiv(total, lane) * lane
        flat = jnp.pad(dif_data.reshape(-1), (0, padded_total - total))
    else:
        padded_total = total
        flat = dif_data.reshape(-1)

    rows = padded_total // lane
    x2d = flat.reshape(rows, lane)

    # Target ~2 MiB per block buffer; row count multiple of 8 (vreg sublane).
    target_bytes = 2 * 1024 * 1024
    if rows <= 8:
        tile_rows = rows  # full (small) dim -> allowed regardless of 8-div
    else:
        tile_rows = min(rows, max(8, target_bytes // (lane * dtype_bytes)))
        tile_rows = max(8, (tile_rows // 8) * 8)

    grid = (pl.cdiv(rows, tile_rows),)

    out2d = pl.pallas_call(
        _make_diffusion_risk_kernel(risk_factor),
        out_shape=jax.ShapeDtypeStruct((rows, lane), dtype),
        grid=grid,
        in_specs=[pl.BlockSpec((tile_rows, lane), lambda i: (i, 0))],
        out_specs=pl.BlockSpec((tile_rows, lane), lambda i: (i, 0)),
        compiler_params=pltpu.CompilerParams(
            dimension_semantics=("parallel",),
        ),
        cost_estimate=pl.CostEstimate(
            flops=2 * total,
            transcendentals=total,
            bytes_accessed=2 * total * dtype_bytes,
        ),
    )(x2d)

    if needs_pad:
        out = out2d.reshape(-1)[:total].reshape(orig_shape)
    else:
        out = out2d.reshape(orig_shape)
    return out


if __name__ == "__main__":
    key = jax.random.PRNGKey(0)
    RISK_FACTOR = 0.75

    # Small NCHW input consistent with the module's elementwise forward.
    x = jax.random.normal(key, (2, 4, 16, 16), dtype=jnp.float32)

    out = diffusion_risk(x, RISK_FACTOR)
    out = jax.block_until_ready(out)

    # Reference check (plain JAX) to validate semantics.
    ref = jax.nn.sigmoid(x * RISK_FACTOR)
    assert out.shape == x.shape and out.dtype == x.dtype
    assert jnp.max(jnp.abs(out - ref)) < 1e-5

    print("KERNEL_OK")
</pallas_src>

<mosaic_0001>
module attributes {stable_mosaic.version = 11 : i64} {
  func.func @kernel(%arg0: i32, %arg1: memref<1x2048xf32, #tpu.memory_space<vmem>>, %arg2: memref<1x2048xf32, #tpu.memory_space<vmem>>) attributes {dimension_semantics = [#tpu.dimension_semantics<parallel>], iteration_bounds = array<i64: 1>, scalar_prefetch = 0 : i64, scratch_operands = 0 : i64, tpu.core_type = #tpu.core_type<tc>, window_params = [{transform_indices = @transform_0, window_bounds = array<i64: 1, 2048>}, {transform_indices = @transform_1, window_bounds = array<i64: 1, 2048>}]} {
    %c0 = arith.constant 0 : index
    %c0_0 = arith.constant 0 : index
    %0 = vector.load %arg1[%c0, %c0_0] : memref<1x2048xf32, #tpu.memory_space<vmem>>, vector<1x2048xf32>
    %cst = arith.constant 7.500000e-01 : f32
    %1 = vector.broadcast %cst : f32 to vector<1x2048xf32>
    %2 = arith.mulf %0, %1 : vector<1x2048xf32>
    %3 = arith.negf %2 : vector<1x2048xf32>
    %4 = math.exp %3 : vector<1x2048xf32>
    %cst_1 = arith.constant 1.000000e+00 : f32
    %5 = vector.broadcast %cst_1 : f32 to vector<1x2048xf32>
    %6 = arith.addf %5, %4 : vector<1x2048xf32>
    %7 = arith.divf %5, %6 : vector<1x2048xf32>
    %c0_2 = arith.constant 0 : index
    %c0_3 = arith.constant 0 : index
    %8 = vector.load %arg2[%c0_2, %c0_3] : memref<1x2048xf32, #tpu.memory_space<vmem>>, vector<1x2048xf32>
    tpu.vector_store %arg2[%c0_2, %c0_3], %7 {strides = array<i32>} : memref<1x2048xf32, #tpu.memory_space<vmem>>, vector<1x2048xf32>,
    return
  }
  func.func @transform_0(%arg0: i32) -> (i32, i32) {
    %c0_i32 = arith.constant 0 : i32
    %c0_i32_0 = arith.constant 0 : i32
    return %arg0, %c0_i32 : i32, i32
  }
  func.func @transform_1(%arg0: i32) -> (i32, i32) {
    %c0_i32 = arith.constant 0 : i32
    %c0_i32_0 = arith.constant 0 : i32
    return %arg0, %c0_i32 : i32, i32
  }
}

</mosaic_0001>

<llo_original>
// kernel: tpu_custom_call.1
$region0: #{tpu_custom_call.1}
  #allocation0 [shape = 'u32[]', space=smem, size = 0x4, offset = 0x4, fixed_abs, tag = 'smem constant byte address 0x4 - core index']
  #allocation1 [shape = 'u32[72,128]{1,0:T(1,128)}', space=vmem, size = 0x9000, scoped, tag = 'internal scratch']
  %s0 = inlined_call_operand.hbm [shape: f32[1,2048], index: 0, kind: input, shape index: {}]
  %s1 = inlined_call_operand.hbm [shape: f32[1,2048], index: 1, kind: output, shape index: {}]
  %s2 = sld [smem:[#allocation0]]
  $region18: #{tpu_custom_call.1} parent=0
    _
  %s4 = ssub.s32 1, %s2
  %s5 = scalar_select 0, %s4, %s2
  $region1: #{tpu_custom_call.1} parent=0
    #allocation2 [shape = 'u8[8192]{0}', space=vmem, size = 0x2000, scoped, tag = 'input window, operand 0, single buffered']
    #allocation3 [shape = 's32[1]{0}', space=sflag, size = 0x4, scoped, tag = 'scoped memory for tpu_custom_call.1']
    #allocation4 [shape = 's32[1]{0}', space=sflag, size = 0x4, scoped, tag = 'scoped memory for tpu_custom_call.1']
    #allocation5 [shape = 'u8[8192]{0}', space=vmem, size = 0x2000, scoped, tag = 'output window, operand 0, single buffered']
    %6 = vsyncpa [#allocation3], 0
    %7 = vsyncpa [#allocation4], 0
    // Predicated region
    $region2: #{tpu_custom_call.1} parent=1 // pred_check
      _
    $region3: #{tpu_custom_call.1} parent=1 // pred_check_branch
      %9 = sbr.rel (0) target = $region5
    $region4: #{tpu_custom_call.1} parent=1 // pred_region
      %11 = vsyncadd [#allocation3], 0
      %s13 = sshll.u32 %s0, 4
      %s14 = int_to_ptr.hbm [resolvable:$true] %s13
      %s15 = sshll.u32 [#allocation2], 4
      %s16 = int_to_ptr.vmem [resolvable:$true] %s15
      %18 = dma.hbm_to_vmem [thread:$0]  %s14, 256, %s16, [#allocation3]
    $region5: #{tpu_custom_call.1} parent=1 // pred_fallthru
      _
    // Predicated region
    $region6: #{tpu_custom_call.1} parent=1 // pred_check
      _
    $region7: #{tpu_custom_call.1} parent=1 // pred_check_branch
      %20 = sbr.rel (0) target = $region9
    $region8: #{tpu_custom_call.1} parent=1 // pred_region
      %22 = dma.done [#allocation3], 256
    $region9: #{tpu_custom_call.1} parent=1 // pred_fallthru
      _
    %v23 = vld [vmem:[#allocation2] sm:$0xff]
    %v24 = vld [vmem:[#allocation2 + $0x8] sm:$0xff]
    %v25 = vmul.f32 %v23, 0.75
    %v26 = vmul.f32 %v24, 0.75
    %v27 = vxor.u32 %v25, 2147483648
    %v28 = vxor.u32 %v26, 2147483648
    %v29 = vmul.f32 %v27, 1.442695
    %v30 = vpow.pop %v29
    %v31 = vmul.f32 %v28, 1.442695
    %v32 = vpow.pop %v31
    %v33 = vadd.f32 %v30, 1.0
    %v34 = vadd.f32 %v32, 1.0
    %v35 = vrcp.pop %v33
    %v36 = vmul.f32 %v33, %v35
    %v37 = vsub.f32 1.0, %v36
    %v38 = vmul.f32 %v35, %v37
    %v39 = vadd.f32 %v35, %v38
    %vm40 = vweird.f32 %v33
    %vm41 = vweird.f32 %v35
    %vm42 = vmor %vm40, %vm41
    %v43 = vsel %vm42, %v35, %v39
    %v44 = vand.u32 2147483647, %v33
    %vm45 = vcmp.eq.f32.partialorder %v44, 8.507059e+37
    %v46 = vand.u32 %v33, 2147483648
    %v47 = vor.u32 1.1754944e-38, %v46
    %v48 = vsel %vm45, %v47, %v43
    %v49 = vmul.f32 1.0, %v48
    %v50 = vrcp.pop %v34
    %v51 = vmul.f32 %v34, %v50
    %v52 = vsub.f32 1.0, %v51
    %v53 = vmul.f32 %v50, %v52
    %v54 = vadd.f32 %v50, %v53
    %vm55 = vweird.f32 %v34
    %vm56 = vweird.f32 %v50
    %vm57 = vmor %vm55, %vm56
    %v58 = vsel %vm57, %v50, %v54
    %v59 = vand.u32 2147483647, %v34
    %vm60 = vcmp.eq.f32.partialorder %v59, 8.507059e+37
    %v61 = vand.u32 %v34, 2147483648
    %v62 = vor.u32 1.1754944e-38, %v61
    %v63 = vsel %vm60, %v62, %v58
    %v64 = vmul.f32 1.0, %v63
    %65 = vst [vmem:[#allocation5] sm:$0xff] %v49
    %66 = vst [vmem:[#allocation5 + $0x8] sm:$0xff] %v64
    // Predicated region
    $region10: #{tpu_custom_call.1} parent=1 // pred_check
      _
    $region11: #{tpu_custom_call.1} parent=1 // pred_check_branch
      %68 = sbr.rel (0) target = $region13
    $region12: #{tpu_custom_call.1} parent=1 // pred_region
      %70 = vsyncadd [#allocation4], 0
      %s72 = sshll.u32 [#allocation5], 4
      %s73 = int_to_ptr.vmem [resolvable:$true] %s72
      %s74 = sshll.u32 %s1, 4
      %s75 = int_to_ptr.hbm [resolvable:$true] %s74
      %77 = dma.vmem_to_hbm [thread:$0]  %s73, 256, %s75, [#allocation4]
    $region13: #{tpu_custom_call.1} parent=1 // pred_fallthru
      _
    // Predicated region
    $region14: #{tpu_custom_call.1} parent=1 // pred_check
      _
    $region15: #{tpu_custom_call.1} parent=1 // pred_check_branch
      %79 = sbr.rel (0) target = $region17
    $region16: #{tpu_custom_call.1} parent=1 // pred_region
      %81 = dma.done [#allocation4], 256
    $region17: #{tpu_custom_call.1} parent=1 // pred_fallthru
      _
    %82 = vsyncpa [#allocation3], 1
    %83 = vsyncpa [#allocation4], 1

</llo_original>
